<compile_context>
chip_gen: v5e
topology: v5e:2x2
jax: 0.10.0
libtpu: 0.0.40
codegen_flags: <defaults>
</compile_context>

<pallas_src>
import math

import jax
import jax.numpy as jnp
from jax.experimental import pallas as pl
from jax.experimental.pallas import tpu as pltpu


def _round_up(x, m):
    return ((x + m - 1) // m) * m


def _pick_tile(padded, candidates=(1024, 512, 384, 256, 128)):
    for c in candidates:
        if padded % c == 0:
            return c
    return 128


# ---------------------------------------------------------------------------
# Fused kernel: BN(eval) + ReLU + 1x1-conv (MXU) + 2x2 avg-pool epilogue
# ---------------------------------------------------------------------------
def _bn_relu_conv_pool_kernel(x_ref, s_ref, b_ref, w_ref, o_ref):
    # x_ref: (tm, Kp) bf16   s_ref/b_ref: (1, Kp) f32   w_ref: (Kp, tn) bf16
    a = jnp.maximum(x_ref[...].astype(jnp.float32) * s_ref[...] + b_ref[...], 0.0)
    y = jnp.dot(a.astype(jnp.bfloat16), w_ref[...],
                preferred_element_type=jnp.float32)          # (tm, tn) f32
    tm, tn = y.shape
    # 2x2 average pool: rows come in groups of 4 = one pool window.
    o_ref[...] = jnp.sum(y.reshape(tm // 4, 4, tn), axis=1) * 0.25


def bn_relu_conv1x1_pool(x2d, scale, shift, w):
    """x2d: (M, K) bf16, rows ordered (n, ho, wo, dh, dw) so each group of 4
    consecutive rows is one 2x2 pool window.  scale/shift: (K,) folded eval BN.
    w: (K, Cout) conv weight.  Returns (M//4, Np) f32, Np = round_up(Cout,128)
    (padded output channels are exactly zero)."""
    M, K = x2d.shape
    K2, Cout = w.shape
    assert K == K2 and M % 4 == 0

    Kp = _round_up(K, 128)
    Np = _round_up(Cout, 128)
    # Full-K single step (no k axis / accumulator); DenseNet transitions have
    # Cin well under a few thousand.
    # TODO(synk): add a K-tiled accumulator path if Cin ever exceeds ~8192.
    tn = Np if Np <= 1024 else _pick_tile(Np)

    budget = 12 << 20   # per-kernel VMEM working set target (double-buffered)

    def fits(tm):
        return (2 * tm * Kp * 2            # LHS bf16, double buffered
                + 2 * Kp * tn * 2          # weight bf16
                + 2 * (tm // 4) * tn * 4   # pooled f32 output
                + 4 * Kp * 4) <= budget    # scale/shift

    cands = (1024, 512, 256, 128, 64, 32)
    tm = None
    for c in cands:                        # prefer >=2 i-blocks (v7x: 2 TCs)
        if M >= 2 * c and fits(c):
            tm = c
            break
    if tm is None:
        for c in cands:
            if M >= c and fits(c):
                tm = c
                break
    if tm is None:
        tm = M                             # tiny input: one full block
    Mp = _round_up(M, tm)

    # Skip the pad entirely when shapes already line up (common case).
    x_p = x2d if (Mp == M and Kp == K) else jnp.pad(
        x2d, ((0, Mp - M), (0, Kp - K)))
    s_p = scale.reshape(1, K).astype(jnp.float32)
    b_p = shift.reshape(1, K).astype(jnp.float32)
    if Kp != K:
        s_p = jnp.pad(s_p, ((0, 0), (0, Kp - K)))
        b_p = jnp.pad(b_p, ((0, 0), (0, Kp - K)))
    w_p = w.astype(jnp.float32)
    if Kp != K or Np != Cout:
        w_p = jnp.pad(w_p, ((0, Kp - K), (0, Np - Cout)))
    w_p = w_p.astype(jnp.bfloat16)

    flops = 2 * Mp * Kp * Np + Mp * Np
    bytes_accessed = Mp * Kp * 2 + Kp * Np * 2 + (Mp // 4) * Np * 4 + 2 * Kp * 4

    out = pl.pallas_call(
        _bn_relu_conv_pool_kernel,
        out_shape=jax.ShapeDtypeStruct((Mp // 4, Np), jnp.float32),
        grid_spec=pltpu.PrefetchScalarGridSpec(
            num_scalar_prefetch=0,
            grid=(Mp // tm, Np // tn),
            in_specs=[
                pl.BlockSpec((tm, Kp), lambda i, j: (i, 0)),   # activation tile
                pl.BlockSpec((1, Kp), lambda i, j: (0, 0)),    # BN scale
                pl.BlockSpec((1, Kp), lambda i, j: (0, 0)),    # BN shift
                pl.BlockSpec((Kp, tn), lambda i, j: (0, j)),   # weight (resident)
            ],
            out_specs=pl.BlockSpec((tm // 4, tn), lambda i, j: (i, j)),
        ),
        compiler_params=pltpu.CompilerParams(
            dimension_semantics=("parallel", "parallel"),
            vmem_limit_bytes=32 * 1024 * 1024),
        cost_estimate=pl.CostEstimate(flops=flops, transcendentals=0,
                                      bytes_accessed=bytes_accessed),
    )(x_p, s_p, b_p, w_p)
    return out[:M // 4]


# ---------------------------------------------------------------------------
# TransitionBlock forward (inference mode)
# ---------------------------------------------------------------------------
def transition_block_forward(params, x_nchw):
    """out = avg_pool2d( conv1x1( relu( bn1(x) ) ), 2 );  dropout = identity (eval)."""
    N, Cin, H, W = x_nchw.shape
    assert H % 2 == 0 and W % 2 == 0
    Cout = params["w"].shape[1]
    Ho, Wo = H // 2, W // 2

    # NCHW -> (N, Ho, Wo, 2, 2, Cin): one interface transpose; every 2x2 pool
    # window becomes 4 consecutive rows of the flattened activation matrix.
    x6 = x_nchw.reshape(N, Cin, Ho, 2, Wo, 2)
    x6 = jnp.transpose(x6, (0, 2, 4, 3, 5, 1))
    x2d = x6.reshape(N * Ho * Wo * 4, Cin).astype(jnp.bfloat16)

    pooled = bn_relu_conv1x1_pool(x2d, params["scale"], params["shift"],
                                  params["w"])                 # (N*Ho*Wo, Np)
    out = pooled[:, :Cout].reshape(N, Ho, Wo, Cout)            # drop chan pad
    return jnp.transpose(out, (0, 3, 1, 2)).astype(x_nchw.dtype)   # NCHW


# ---------------------------------------------------------------------------
# deterministic synthetic parameters (torch shapes implied)
# ---------------------------------------------------------------------------
def make_params(key, in_planes, out_planes, eps=1e-5):
    k1, k2, k3, k4, k5 = jax.random.split(key, 5)
    gamma = 1.0 + 0.1 * jax.random.normal(k1, (in_planes,), jnp.float32)
    beta = 0.1 * jax.random.normal(k2, (in_planes,), jnp.float32)
    mean = 0.1 * jax.random.normal(k3, (in_planes,), jnp.float32)
    var = 1.0 + 0.05 * jnp.abs(jax.random.normal(k4, (in_planes,), jnp.float32))
    scale = gamma / jnp.sqrt(var + eps)          # eval-mode BN fold
    shift = beta - mean * scale
    # torch Conv2d(in, out, 1, bias=False) weight (out, in, 1, 1) -> stored (in, out)
    w = jax.random.normal(k5, (in_planes, out_planes), jnp.float32) / math.sqrt(in_planes)
    return {"scale": scale, "shift": shift, "w": w}


if __name__ == "__main__":
    key = jax.random.PRNGKey(0)
    pkey, xkey = jax.random.split(key)

    IN_PLANES, OUT_PLANES = 64, 32
    params = make_params(pkey, IN_PLANES, OUT_PLANES)
    x = jax.random.normal(xkey, (2, IN_PLANES, 16, 16), jnp.float32)

    fwd = jax.jit(transition_block_forward)
    out = jax.block_until_ready(fwd(params, x))

    assert out.shape == (2, OUT_PLANES, 8, 8), out.shape
    assert bool(jnp.all(jnp.isfinite(out)))

    # pure-JAX f32 reference (loose tolerance: bf16 activation + bf16 MXU feed)
    def ref_forward(p, xin):
        y = xin * p["scale"][None, :, None, None] + p["shift"][None, :, None, None]
        y = jnp.maximum(y, 0.0)
        z = jnp.einsum("nchw,co->nohw", y, p["w"])
        nb, co, hh, ww = z.shape
        return z.reshape(nb, co, hh // 2, 2, ww // 2, 2).mean(axis=(3, 5))

    ref = ref_forward(params, x)
    err = float(jnp.max(jnp.abs(out - ref)))
    assert err < 5e-2, f"max abs err {err}"
    print("KERNEL_OK")
</pallas_src>

<mosaic_0001>
module attributes {stable_mosaic.version = 11 : i64} {
  func.func @_bn_relu_conv_pool_kernel(%arg0: i32, %arg1: i32, %arg2: memref<256x128xbf16, #tpu.memory_space<vmem>>, %arg3: memref<1x128xf32, #tpu.memory_space<vmem>>, %arg4: memref<1x128xf32, #tpu.memory_space<vmem>>, %arg5: memref<128x128xbf16, #tpu.memory_space<vmem>>, %arg6: memref<64x128xf32, #tpu.memory_space<vmem>>) attributes {dimension_semantics = [#tpu.dimension_semantics<parallel>, #tpu.dimension_semantics<parallel>], iteration_bounds = array<i64: 2, 1>, scalar_prefetch = 0 : i64, scratch_operands = 0 : i64, tpu.core_type = #tpu.core_type<tc>, window_params = [{transform_indices = @transform_0, window_bounds = array<i64: 256, 128>}, {pipeline_mode = #tpu.pipeline_mode<synchronous>, transform_indices = @transform_1, window_bounds = array<i64: 1, 128>}, {pipeline_mode = #tpu.pipeline_mode<synchronous>, transform_indices = @transform_2, window_bounds = array<i64: 1, 128>}, {transform_indices = @transform_3, window_bounds = array<i64: 128, 128>}, {transform_indices = @transform_4, window_bounds = array<i64: 64, 128>}]} {
    %c0 = arith.constant 0 : index
    %c0_0 = arith.constant 0 : index
    %0 = vector.load %arg2[%c0, %c0_0] : memref<256x128xbf16, #tpu.memory_space<vmem>>, vector<256x128xbf16>
    %1 = arith.extf %0 : vector<256x128xbf16> to vector<256x128xf32>
    %c0_1 = arith.constant 0 : index
    %c0_2 = arith.constant 0 : index
    %2 = vector.load %arg3[%c0_1, %c0_2] : memref<1x128xf32, #tpu.memory_space<vmem>>, vector<1x128xf32>
    %3 = vector.broadcast %2 : vector<1x128xf32> to vector<256x128xf32>
    %4 = arith.mulf %1, %3 : vector<256x128xf32>
    %c0_3 = arith.constant 0 : index
    %c0_4 = arith.constant 0 : index
    %5 = vector.load %arg4[%c0_3, %c0_4] : memref<1x128xf32, #tpu.memory_space<vmem>>, vector<1x128xf32>
    %6 = vector.broadcast %5 : vector<1x128xf32> to vector<256x128xf32>
    %7 = arith.addf %4, %6 : vector<256x128xf32>
    %cst = arith.constant 0.000000e+00 : f32
    %8 = vector.broadcast %cst : f32 to vector<256x128xf32>
    %9 = arith.maximumf %7, %8 : vector<256x128xf32>
    %10 = arith.truncf %9 : vector<256x128xf32> to vector<256x128xbf16>
    %c0_5 = arith.constant 0 : index
    %c0_6 = arith.constant 0 : index
    %11 = vector.load %arg5[%c0_5, %c0_6] : memref<128x128xbf16, #tpu.memory_space<vmem>>, vector<128x128xbf16>
    %cst_7 = arith.constant dense<0.000000e+00> : vector<256x128xf32>
    %12 = tpu.matmul %10, %11, %cst_7 {dimension_numbers = #tpu.dot_dimension_numbers<[1], [0], [0], [1], [0, 0, 1, 1], [], []>} : vector<256x128xbf16>, vector<128x128xbf16>, vector<256x128xf32> -> vector<256x128xf32>
    %13 = vector.shape_cast %12 : vector<256x128xf32> to vector<64x4x128xf32>
    %cst_8 = arith.constant dense<0.000000e+00> : vector<64x128xf32>
    %14 = vector.multi_reduction <add>, %13, %cst_8 [1] : vector<64x4x128xf32> to vector<64x128xf32>
    %cst_9 = arith.constant 2.500000e-01 : f32
    %15 = vector.broadcast %cst_9 : f32 to vector<64x128xf32>
    %16 = arith.mulf %14, %15 : vector<64x128xf32>
    %c0_10 = arith.constant 0 : index
    %c0_11 = arith.constant 0 : index
    %17 = vector.load %arg6[%c0_10, %c0_11] : memref<64x128xf32, #tpu.memory_space<vmem>>, vector<64x128xf32>
    tpu.vector_store %arg6[%c0_10, %c0_11], %16 {strides = array<i32>} : memref<64x128xf32, #tpu.memory_space<vmem>>, vector<64x128xf32>,
    return
  }
  func.func @transform_0(%arg0: i32, %arg1: i32) -> (i32, i32) {
    %c0_i32 = arith.constant 0 : i32
    %c0_i32_0 = arith.constant 0 : i32
    return %arg0, %c0_i32 : i32, i32
  }
  func.func @transform_1(%arg0: i32, %arg1: i32) -> (i32, i32) {
    %c0_i32 = arith.constant 0 : i32
    %c0_i32_0 = arith.constant 0 : i32
    %c0_i32_1 = arith.constant 0 : i32
    return %c0_i32, %c0_i32_0 : i32, i32
  }
  func.func @transform_2(%arg0: i32, %arg1: i32) -> (i32, i32) {
    %c0_i32 = arith.constant 0 : i32
    %c0_i32_0 = arith.constant 0 : i32
    %c0_i32_1 = arith.constant 0 : i32
    return %c0_i32, %c0_i32_0 : i32, i32
  }
  func.func @transform_3(%arg0: i32, %arg1: i32) -> (i32, i32) {
    %c0_i32 = arith.constant 0 : i32
    %c0_i32_0 = arith.constant 0 : i32
    return %c0_i32, %arg1 : i32, i32
  }
  func.func @transform_4(%arg0: i32, %arg1: i32) -> (i32, i32) {
    %c0_i32 = arith.constant 0 : i32
    return %arg0, %arg1 : i32, i32
  }
}

</mosaic_0001>

<llo_original>
// kernel: transition_block_forward.1
$region0: #{transition_block_forward.1}
  #allocation0 [shape = 'u32[]', space=smem, size = 0x4, offset = 0x4, fixed_abs, tag = 'smem constant byte address 0x4 - core index']
  #allocation1 [shape = 'u32[72,128]{1,0:T(1,128)}', space=vmem, size = 0x9000, scoped, tag = 'internal scratch']
  %s0 = inlined_call_operand.vmem [shape: bf16[512,128], index: 0, kind: input, shape index: {}]
  %s1 = inlined_call_operand.vmem [shape: f32[1,128], index: 1, kind: input, shape index: {}]
  %s2 = inlined_call_operand.vmem [shape: f32[1,128], index: 2, kind: input, shape index: {}]
  %s3 = inlined_call_operand.vmem [shape: bf16[128,128], index: 3, kind: input, shape index: {}]
  %s4 = inlined_call_operand.hbm [shape: f32[128,128], index: 4, kind: output, shape index: {}]
  %s5 = sld [smem:[#allocation0]]
  $region49: #{transition_block_forward.1} parent=0
    _
  %s7 = ssub.s32 1, %s5
  %s8 = scalar_select 0, %s7, %s5
  $region1: #{transition_block_forward.1} parent=0
    #allocation2 [shape = 'u8[65536]{0}', space=vmem, size = 0x10000, scoped, tag = 'output window, operand 0']
    #allocation3 [shape = 's32[2]{0}', space=sflag, size = 0x8, scoped, tag = 'scoped memory for transition_block_forward.1']
    %9 = vsyncpa [#allocation3], 0
    %s10 = scalar_lea.sflag [#allocation3], 1
    %11 = vsyncpa %s10, 0
    loop: start=0, step=1, limit=4
    $region2: #{transition_block_forward.1} parent=1 // loop_pre_header
      _
    $region3: #{transition_block_forward.1} parent=1 // loop_header
      %s13 = sphi 0, %s17
      %p14 = scmp.ge.s32.totalorder %s13, 4
      %s20 = sphi 0, %s32
      %s21 = sphi 0, %s28
      %s22 = sphi 0, %s20
      %s23 = sphi 0, %s21
      %s24 = sphi 0, %s22
      %s25 = sphi 0, %s23
      %s35 = sphi 0, %s37
      %s38 = sphi 0, %s35
      %s39 = sphi 0, %s38
      %s55 = sphi 0, %s39
      %s59 = sphi 0, %s59
      %s61 = sphi 0, %s59
      %s62 = sphi 0, %s61
      %s76 = sphi 0, %s62
      %s80 = sphi 0, %s80
      %s82 = sphi 0, %s80
      %s83 = sphi 0, %s82
      %s97 = sphi 0, %s83
      %s103 = sphi 0, %s105
      %s106 = sphi 0, %s103
      %s107 = sphi 0, %s106
      %s123 = sphi 0, %s107
      %s131 = sphi 0, %s133
      %s134 = sphi 0, %s131
      %s135 = sphi 0, %s134
      %s151 = sphi 0, %s135
    $region4: #{transition_block_forward.1} parent=1 // loop_header_branch
      %16 = sbr.rel (%p14) target = $region8
    $region5: #{transition_block_forward.1} parent=1 // loop_body
      %s18 = ssub.s32 %s13, 1
      %s19 = ssub.s32 %s13, 2
      %s26 = sadd.s32 1, %s21
      %p27 = scmp.ge.s32.totalorder %s26, 1
      %s28 = scalar_select %p27, 0, %s26
      %s29 = sadd.s32 1, %s20
      %s30 = scalar_select %p27, %s29, %s20
      %p31 = scmp.ge.s32.totalorder %s30, 2
      %s32 = scalar_select %p31, 0, %s30
      %s33 = ssub.s32 %s20, %s32
      %p34 = scmp.eq.s32.totalorder %s33, 0
      %s36 = sadd.s32 %s35, 1
      %s37 = scalar_select %p34, %s35, %s36
      %p40 = pneg %p34
      %p41 = scmp.eq.s32.totalorder %s13, 1
      %p42 = por %p40, %p41
      %p43 = scmp.ne.s32.totalorder %s35, %s38
      %p44 = scmp.eq.s32.totalorder %s13, 0
      %p45 = por %p43, %p44
      %p46 = scmp.ne.s32.totalorder %s35, %s38
      %p47 = scmp.eq.s32.totalorder %s18, 1
      %p48 = por %p46, %p47
      %p49 = scmp.ne.s32.totalorder %s38, %s39
      %p50 = scmp.eq.s32.totalorder %s18, 0
      %p51 = por %p49, %p50
      %p52 = scmp.ne.s32.totalorder %s38, %s39
      %p53 = scmp.eq.s32.totalorder %s19, 1
      %p54 = por %p52, %p53
      %p56 = scmp.ne.s32.totalorder %s39, %s55
      %p57 = scmp.eq.s32.totalorder %s19, 0
      %p58 = por %p56, %p57
      %s60 = sadd.s32 %s59, 1
      %p63 = scmp.eq.s32.totalorder %s13, 1
      %p64 = scmp.ne.s32.totalorder %s59, %s61
      %p65 = scmp.eq.s32.totalorder %s13, 0
      %p66 = por %p64, %p65
      %p67 = scmp.ne.s32.totalorder %s59, %s61
      %p68 = scmp.eq.s32.totalorder %s18, 1
      %p69 = por %p67, %p68
      %p70 = scmp.ne.s32.totalorder %s61, %s62
      %p71 = scmp.eq.s32.totalorder %s18, 0
      %p72 = por %p70, %p71
      %p73 = scmp.ne.s32.totalorder %s61, %s62
      %p74 = scmp.eq.s32.totalorder %s19, 1
      %p75 = por %p73, %p74
      %p77 = scmp.ne.s32.totalorder %s62, %s76
      %p78 = scmp.eq.s32.totalorder %s19, 0
      %p79 = por %p77, %p78
      %s81 = sadd.s32 %s80, 1
      %p84 = scmp.eq.s32.totalorder %s13, 1
      %p85 = scmp.ne.s32.totalorder %s80, %s82
      %p86 = scmp.eq.s32.totalorder %s13, 0
      %p87 = por %p85, %p86
      %p88 = scmp.ne.s32.totalorder %s80, %s82
      %p89 = scmp.eq.s32.totalorder %s18, 1
      %p90 = por %p88, %p89
      %p91 = scmp.ne.s32.totalorder %s82, %s83
      %p92 = scmp.eq.s32.totalorder %s18, 0
      %p93 = por %p91, %p92
      %p94 = scmp.ne.s32.totalorder %s82, %s83
      %p95 = scmp.eq.s32.totalorder %s19, 1
      %p96 = por %p94, %p95
      %p98 = scmp.ne.s32.totalorder %s83, %s97
      %p99 = scmp.eq.s32.totalorder %s19, 0
      %p100 = por %p98, %p99
      %s101 = ssub.s32 %s21, %s28
      %p102 = scmp.eq.s32.totalorder %s101, 0
      %s104 = sadd.s32 %s103, 1
      %s105 = scalar_select %p102, %s103, %s104
      %p108 = pneg %p102
      %p109 = scmp.eq.s32.totalorder %s13, 1
      %p110 = por %p108, %p109
      %p111 = scmp.ne.s32.totalorder %s103, %s106
      %p112 = scmp.eq.s32.totalorder %s13, 0
      %p113 = por %p111, %p112
      %p114 = scmp.ne.s32.totalorder %s103, %s106
      %p115 = scmp.eq.s32.totalorder %s18, 1
      %p116 = por %p114, %p115
      %p117 = scmp.ne.s32.totalorder %s106, %s107
      %p118 = scmp.eq.s32.totalorder %s18, 0
      %p119 = por %p117, %p118
      %p120 = scmp.ne.s32.totalorder %s106, %s107
      %p121 = scmp.eq.s32.totalorder %s19, 1
      %p122 = por %p120, %p121
      %p124 = scmp.ne.s32.totalorder %s107, %s123
      %p125 = scmp.eq.s32.totalorder %s19, 0
      %p126 = por %p124, %p125
      %s127 = ssub.s32 %s20, %s32
      %s128 = ssub.s32 %s21, %s28
      %s129 = sor.u32 %s127, %s128
      %p130 = scmp.eq.s32.totalorder %s129, 0
      %s132 = sadd.s32 %s131, 1
      %s133 = scalar_select %p130, %s131, %s132
      %p136 = pneg %p130
      %p137 = scmp.eq.s32.totalorder %s13, 1
      %p138 = por %p136, %p137
      %p139 = scmp.ne.s32.totalorder %s131, %s134
      %p140 = scmp.eq.s32.totalorder %s13, 0
      %p141 = por %p139, %p140
      %p142 = scmp.ne.s32.totalorder %s131, %s134
      %p143 = scmp.eq.s32.totalorder %s18, 1
      %p144 = por %p142, %p143
      %p145 = scmp.ne.s32.totalorder %s134, %s135
      %p146 = scmp.eq.s32.totalorder %s18, 0
      %p147 = por %p145, %p146
      %p148 = scmp.ne.s32.totalorder %s134, %s135
      %p149 = scmp.eq.s32.totalorder %s19, 1
      %p150 = por %p148, %p149
      %p152 = scmp.ne.s32.totalorder %s135, %s151
      %p153 = scmp.eq.s32.totalorder %s19, 0
      %p154 = por %p152, %p153
      %p155 = scmp.le.s32.totalorder 1, %s13
      %p156 = scmp.lt.s32.totalorder %s13, 3
      %p157 = pnand %p155, %p156
      %p158 = pneg %p157
      // Predicated region
      $region9: #{transition_block_forward.1} parent=5 // pred_check
        _
      $region10: #{transition_block_forward.1} parent=5 // pred_check_branch
        %160 = sbr.rel (%p157) target = $region12
      $region11: #{transition_block_forward.1} parent=5 // pred_region
        %s161 = ssub.s32 %s13, 1
        // Predicated region
        $region13: #{transition_block_forward.1} parent=11 // pred_check
          %p162 = pneg %p72
        $region14: #{transition_block_forward.1} parent=11 // pred_check_branch
          %164 = sbr.rel (%p162) target = $region16
        $region15: #{transition_block_forward.1} parent=11 // pred_region
          _
        $region16: #{transition_block_forward.1} parent=11 // pred_fallthru
          _
        // Predicated region
        $region17: #{transition_block_forward.1} parent=11 // pred_check
          %p165 = pneg %p93
        $region18: #{transition_block_forward.1} parent=11 // pred_check_branch
          %167 = sbr.rel (%p165) target = $region20
        $region19: #{transition_block_forward.1} parent=11 // pred_region
          _
        $region20: #{transition_block_forward.1} parent=11 // pred_fallthru
          _
        // Predicated region
        $region21: #{transition_block_forward.1} parent=11 // pred_check
          %p168 = pneg %p119
        $region22: #{transition_block_forward.1} parent=11 // pred_check_branch
          %170 = sbr.rel (%p168) target = $region24
        $region23: #{transition_block_forward.1} parent=11 // pred_region
          %p171 = scmp.lt.s32.totalorder %s23, 0
          %s172 = scalar_select %p171, %s23, 0
          %s173 = smul.addr %s172, 4
          %s174 = scalar_lea.vmem %s3, %s173
        $region24: #{transition_block_forward.1} parent=11 // pred_fallthru
          _
      $region12: #{transition_block_forward.1} parent=5 // pred_fallthru
        _
      %p175 = scmp.lt.s32.totalorder %s13, 2
      // Predicated region
      $region25: #{transition_block_forward.1} parent=5 // pred_check
        %p176 = pneg %p175
      $region26: #{transition_block_forward.1} parent=5 // pred_check_branch
        %178 = sbr.rel (%p176) target = $region28
      $region27: #{transition_block_forward.1} parent=5 // pred_region
        // Predicated region
        $region29: #{transition_block_forward.1} parent=27 // pred_check
          %p179 = pneg %p45
        $region30: #{transition_block_forward.1} parent=27 // pred_check_branch
          %181 = sbr.rel (%p179) target = $region32
        $region31: #{transition_block_forward.1} parent=27 // pred_region
          %s182 = smul.u32 32, %s20
          %p183 = scmp.lt.s32.totalorder %s182, 63
          %s184 = scalar_select %p183, %s182, 63
          %s185 = smul.addr %s184, 4
          %s186 = scalar_lea.vmem %s0, %s185
          %s187 = smul.u32 32, %s20
        $region32: #{transition_block_forward.1} parent=27 // pred_fallthru
          _
      $region28: #{transition_block_forward.1} parent=5 // pred_fallthru
        _
      %p188 = scmp.le.s32.totalorder 1, %s13
      %p189 = scmp.lt.s32.totalorder %s13, 3
      %p190 = pnand %p188, %p189
      %p191 = pneg %p190
      // Predicated region
      $region33: #{transition_block_forward.1} parent=5 // pred_check
        _
      $region34: #{transition_block_forward.1} parent=5 // pred_check_branch
        %193 = sbr.rel (%p190) target = $region36
      $region35: #{transition_block_forward.1} parent=5 // pred_region
        %s194 = ssub.s32 %s13, 1
        %s195 = smul.u32 32, %s22
        %p196 = scmp.lt.s32.totalorder %s195, 63
        %s197 = scalar_select %p196, %s195, 63
        %s198 = smul.addr %s197, 4
        %s199 = scalar_lea.vmem %s0, %s198
        %p200 = pneg %p51
        %p201 = pneg %p48
        %p202 = pneg %p72
        %p203 = pneg %p69
        %p204 = pneg %p93
        %p205 = pneg %p90
        %p206 = scmp.lt.s32.totalorder %s23, 0
        %s207 = scalar_select %p206, %s23, 0
        %s208 = smul.addr %s207, 4
        %s209 = scalar_lea.vmem %s3, %s208
        %p210 = pneg %p119
        %p211 = pneg %p116
        %p212 = pneg %p147
        %p213 = pneg %p144
        %s214 = sand.u32 %s134, 1
        %s215 = scalar_lea.sflag [#allocation3], %s214
        %s216 = sand.u32 %s134, 1
        %s217 = smul.addr %s216, 64
        %s218 = scalar_lea.vmem [#allocation2], %s217
        %s219 = smul.u32 32, %s22
        %p220 = scmp.lt.s32.totalorder %s219, 63
        %s221 = scalar_select %p220, %s219, 63
        %s222 = smul.addr %s221, 4
        %s223 = scalar_lea.vmem %s0, %s222
        %s224 = smul.u32 32, %s22
        %p225 = scmp.lt.s32.totalorder %s23, 0
        %s226 = scalar_select %p225, %s23, 0
        %s227 = smul.addr %s226, 4
        %s228 = scalar_lea.vmem %s3, %s227
        %s229 = smul.u32 8, %s22
        %v230 = vld [vmem:[%s223] sm:$0xf]
        %v231 = vld [vmem:[%s223 + $0x4] sm:$0xf]
        %v232 = vld [vmem:[%s223 + $0x8] sm:$0xf]
        %v233 = vld [vmem:[%s223 + $0xc] sm:$0xf]
        %v234 = vld [vmem:[%s223 + $0x10] sm:$0xf]
        %v235 = vld [vmem:[%s223 + $0x14] sm:$0xf]
        %v236 = vld [vmem:[%s223 + $0x18] sm:$0xf]
        %v237 = vld [vmem:[%s223 + $0x1c] sm:$0xf]
        %v238 = vld [vmem:[%s223 + $0x20] sm:$0xf]
        %v239 = vld [vmem:[%s223 + $0x24] sm:$0xf]
        %v240 = vld [vmem:[%s223 + $0x28] sm:$0xf]
        %v241 = vld [vmem:[%s223 + $0x2c] sm:$0xf]
        %v242 = vld [vmem:[%s223 + $0x30] sm:$0xf]
        %v243 = vld [vmem:[%s223 + $0x34] sm:$0xf]
        %v244 = vld [vmem:[%s223 + $0x38] sm:$0xf]
        %v245 = vld [vmem:[%s223 + $0x3c] sm:$0xf]
        %v246 = vld [vmem:[%s223 + $0x40] sm:$0xf]
        %v247 = vld [vmem:[%s223 + $0x44] sm:$0xf]
        %v248 = vld [vmem:[%s223 + $0x48] sm:$0xf]
        %v249 = vld [vmem:[%s223 + $0x4c] sm:$0xf]
        %v250 = vld [vmem:[%s223 + $0x50] sm:$0xf]
        %v251 = vld [vmem:[%s223 + $0x54] sm:$0xf]
        %v252 = vld [vmem:[%s223 + $0x58] sm:$0xf]
        %v253 = vld [vmem:[%s223 + $0x5c] sm:$0xf]
        %v254 = vld [vmem:[%s223 + $0x60] sm:$0xf]
        %v255 = vld [vmem:[%s223 + $0x64] sm:$0xf]
        %v256 = vld [vmem:[%s223 + $0x68] sm:$0xf]
        %v257 = vld [vmem:[%s223 + $0x6c] sm:$0xf]
        %v258 = vld [vmem:[%s223 + $0x70] sm:$0xf]
        %v259 = vld [vmem:[%s223 + $0x74] sm:$0xf]
        %v260 = vld [vmem:[%s223 + $0x78] sm:$0xf]
        %v261 = vld [vmem:[%s223 + $0x7c] sm:$0xf]
        %v262 = vunpack.c.l.bf16 %v230
        %v263 = vunpack.c.l.bf16 %v231
        %v264 = vunpack.c.l.bf16 %v232
        %v265 = vunpack.c.l.bf16 %v233
        %v266 = vunpack.c.l.bf16 %v234
        %v267 = vunpack.c.l.bf16 %v235
        %v268 = vunpack.c.l.bf16 %v236
        %v269 = vunpack.c.l.bf16 %v237
        %v270 = vunpack.c.l.bf16 %v238
        %v271 = vunpack.c.l.bf16 %v239
        %v272 = vunpack.c.l.bf16 %v240
        %v273 = vunpack.c.l.bf16 %v241
        %v274 = vunpack.c.l.bf16 %v242
        %v275 = vunpack.c.l.bf16 %v243
        %v276 = vunpack.c.l.bf16 %v244
        %v277 = vunpack.c.l.bf16 %v245
        %v278 = vunpack.c.l.bf16 %v246
        %v279 = vunpack.c.l.bf16 %v247
        %v280 = vunpack.c.l.bf16 %v248
        %v281 = vunpack.c.l.bf16 %v249
        %v282 = vunpack.c.l.bf16 %v250
        %v283 = vunpack.c.l.bf16 %v251
        %v284 = vunpack.c.l.bf16 %v252
        %v285 = vunpack.c.l.bf16 %v253
        %v286 = vunpack.c.l.bf16 %v254
        %v287 = vunpack.c.l.bf16 %v255
        %v288 = vunpack.c.l.bf16 %v256
        %v289 = vunpack.c.l.bf16 %v257
        %v290 = vunpack.c.l.bf16 %v258
        %v291 = vunpack.c.l.bf16 %v259
        %v292 = vunpack.c.l.bf16 %v260
        %v293 = vunpack.c.l.bf16 %v261
        %v294 = vld [vmem:[%s1] sm:$0x1]
        %v296 = vperm.slane %v294, 0
        %v298 = vmul.f32 %v262, %v296
        %v299 = vmul.f32 %v263, %v296
        %v300 = vmul.f32 %v264, %v296
        %v301 = vmul.f32 %v265, %v296
        %v302 = vmul.f32 %v266, %v296
        %v303 = vmul.f32 %v267, %v296
        %v304 = vmul.f32 %v268, %v296
        %v305 = vmul.f32 %v269, %v296
        %v306 = vmul.f32 %v270, %v296
        %v307 = vmul.f32 %v271, %v296
        %v308 = vmul.f32 %v272, %v296
        %v309 = vmul.f32 %v273, %v296
        %v310 = vmul.f32 %v274, %v296
        %v311 = vmul.f32 %v275, %v296
        %v312 = vmul.f32 %v276, %v296
        %v313 = vmul.f32 %v277, %v296
        %v314 = vmul.f32 %v278, %v296
        %v315 = vmul.f32 %v279, %v296
        %v316 = vmul.f32 %v280, %v296
        %v317 = vmul.f32 %v281, %v296
        %v318 = vmul.f32 %v282, %v296
        %v319 = vmul.f32 %v283, %v296
        %v320 = vmul.f32 %v284, %v296
        %v321 = vmul.f32 %v285, %v296
        %v322 = vmul.f32 %v286, %v296
        %v323 = vmul.f32 %v287, %v296
        %v324 = vmul.f32 %v288, %v296
        %v325 = vmul.f32 %v289, %v296
        %v326 = vmul.f32 %v290, %v296
        %v327 = vmul.f32 %v291, %v296
        %v328 = vmul.f32 %v292, %v296
        %v329 = vmul.f32 %v293, %v296
        %v330 = vld [vmem:[%s2] sm:$0x1]
        %v332 = vperm.slane %v330, 0
        %v334 = vadd.f32 %v298, %v332
        %v335 = vadd.f32 %v299, %v332
        %v336 = vadd.f32 %v300, %v332
        %v337 = vadd.f32 %v301, %v332
        %v338 = vadd.f32 %v302, %v332
        %v339 = vadd.f32 %v303, %v332
        %v340 = vadd.f32 %v304, %v332
        %v341 = vadd.f32 %v305, %v332
        %v342 = vadd.f32 %v306, %v332
        %v343 = vadd.f32 %v307, %v332
        %v344 = vadd.f32 %v308, %v332
        %v345 = vadd.f32 %v309, %v332
        %v346 = vadd.f32 %v310, %v332
        %v347 = vadd.f32 %v311, %v332
        %v348 = vadd.f32 %v312, %v332
        %v349 = vadd.f32 %v313, %v332
        %v350 = vadd.f32 %v314, %v332
        %v351 = vadd.f32 %v315, %v332
        %v352 = vadd.f32 %v316, %v332
        %v353 = vadd.f32 %v317, %v332
        %v354 = vadd.f32 %v318, %v332
        %v355 = vadd.f32 %v319, %v332
        %v356 = vadd.f32 %v320, %v332
        %v357 = vadd.f32 %v321, %v332
        %v358 = vadd.f32 %v322, %v332
        %v359 = vadd.f32 %v323, %v332
        %v360 = vadd.f32 %v324, %v332
        %v361 = vadd.f32 %v325, %v332
        %v362 = vadd.f32 %v326, %v332
        %v363 = vadd.f32 %v327, %v332
        %v364 = vadd.f32 %v328, %v332
        %v365 = vadd.f32 %v329, %v332
        %v366 = vmax.f32 %v334, 0.0
        %v367 = vmax.f32 %v335, 0.0
        %v368 = vmax.f32 %v336, 0.0
        %v369 = vmax.f32 %v337, 0.0
        %v370 = vmax.f32 %v338, 0.0
        %v371 = vmax.f32 %v339, 0.0
        %v372 = vmax.f32 %v340, 0.0
        %v373 = vmax.f32 %v341, 0.0
        %v374 = vmax.f32 %v342, 0.0
        %v375 = vmax.f32 %v343, 0.0
        %v376 = vmax.f32 %v344, 0.0
        %v377 = vmax.f32 %v345, 0.0
        %v378 = vmax.f32 %v346, 0.0
        %v379 = vmax.f32 %v347, 0.0
        %v380 = vmax.f32 %v348, 0.0
        %v381 = vmax.f32 %v349, 0.0
        %v382 = vmax.f32 %v350, 0.0
        %v383 = vmax.f32 %v351, 0.0
        %v384 = vmax.f32 %v352, 0.0
        %v385 = vmax.f32 %v353, 0.0
        %v386 = vmax.f32 %v354, 0.0
        %v387 = vmax.f32 %v355, 0.0
        %v388 = vmax.f32 %v356, 0.0
        %v389 = vmax.f32 %v357, 0.0
        %v390 = vmax.f32 %v358, 0.0
        %v391 = vmax.f32 %v359, 0.0
        %v392 = vmax.f32 %v360, 0.0
        %v393 = vmax.f32 %v361, 0.0
        %v394 = vmax.f32 %v362, 0.0
        %v395 = vmax.f32 %v363, 0.0
        %v396 = vmax.f32 %v364, 0.0
        %v397 = vmax.f32 %v365, 0.0
        %v398 = vpack.c.bf16 %v367, %v366
        %v399 = vpack.c.bf16 %v369, %v368
        %v400 = vpack.c.bf16 %v371, %v370
        %v401 = vpack.c.bf16 %v373, %v372
        %v402 = vpack.c.bf16 %v375, %v374
        %v403 = vpack.c.bf16 %v377, %v376
        %v404 = vpack.c.bf16 %v379, %v378
        %v405 = vpack.c.bf16 %v381, %v380
        %v406 = vpack.c.bf16 %v383, %v382
        %v407 = vpack.c.bf16 %v385, %v384
        %v408 = vpack.c.bf16 %v387, %v386
        %v409 = vpack.c.bf16 %v389, %v388
        %v410 = vpack.c.bf16 %v391, %v390
        %v411 = vpack.c.bf16 %v393, %v392
        %v412 = vpack.c.bf16 %v395, %v394
        %v413 = vpack.c.bf16 %v397, %v396
        %v414 = vld [vmem:[%s228] sm:$0xf]
        %v415 = vld [vmem:[%s228 + $0x4] sm:$0xf]
        %v416 = vld [vmem:[%s228 + $0x8] sm:$0xf]
        %v417 = vld [vmem:[%s228 + $0xc] sm:$0xf]
        %v418 = vld [vmem:[%s228 + $0x10] sm:$0xf]
        %v419 = vld [vmem:[%s228 + $0x14] sm:$0xf]
        %v420 = vld [vmem:[%s228 + $0x18] sm:$0xf]
        %v421 = vld [vmem:[%s228 + $0x1c] sm:$0xf]
        %v422 = vld [vmem:[%s228 + $0x20] sm:$0xf]
        %v423 = vld [vmem:[%s228 + $0x24] sm:$0xf]
        %v424 = vld [vmem:[%s228 + $0x28] sm:$0xf]
        %v425 = vld [vmem:[%s228 + $0x2c] sm:$0xf]
        %v426 = vld [vmem:[%s228 + $0x30] sm:$0xf]
        %v427 = vld [vmem:[%s228 + $0x34] sm:$0xf]
        %v428 = vld [vmem:[%s228 + $0x38] sm:$0xf]
        %v429 = vld [vmem:[%s228 + $0x3c] sm:$0xf]
        %v446 = vunpack.c.l.b16 %v414
        %v447 = vunpack.c.l.b16 %v415
        %v448 = vunpack.c.l.b16 %v416
        %v449 = vunpack.c.l.b16 %v417
        %v450 = vunpack.c.l.b16 %v418
        %v451 = vunpack.c.l.b16 %v419
        %v452 = vunpack.c.l.b16 %v420
        %v453 = vunpack.c.l.b16 %v421
        %v454 = vunpack.c.l.b16 %v422
        %v455 = vunpack.c.l.b16 %v423
        %v456 = vunpack.c.l.b16 %v424
        %v457 = vunpack.c.l.b16 %v425
        %v458 = vunpack.c.l.b16 %v426
        %v459 = vunpack.c.l.b16 %v427
        %v460 = vunpack.c.l.b16 %v428
        %v461 = vunpack.c.l.b16 %v429
        %v462 = vpack.c.b16 %v447, %v446
        %v463 = vpack.c.b16 %v449, %v448
        %v464 = vpack.c.b16 %v451, %v450
        %v465 = vpack.c.b16 %v453, %v452
        %v466 = vpack.c.b16 %v455, %v454
        %v467 = vpack.c.b16 %v457, %v456
        %v468 = vpack.c.b16 %v459, %v458
        %v469 = vpack.c.b16 %v461, %v460
        %478 = vmatpush.bf16.msra.mxu0 %v469
        %479 = vmatpush.bf16.msra.mxu0 %v468
        %480 = vmatpush.bf16.msra.mxu0 %v467
        %481 = vmatpush.bf16.msra.mxu0 %v466
        %482 = vmatpush.bf16.msra.mxu0 %v465
        %483 = vmatpush.bf16.msra.mxu0 %v464
        %484 = vmatpush.bf16.msra.mxu0 %v463
        %485 = vmatpush.bf16.msra.mxu0 %v462
        %486 = vmatmul.bf16.gmra.mxu0 %v398
        %v487 = vpop.f32.mrf.mxu0
        %v488 = vadd.f32 0.0, %v487
        %v489 = vpop.f32.mrf.mxu0
        %v490 = vadd.f32 0.0, %v489
        %491 = vmatmul.bf16.gmra.mxu0 %v399
        %v492 = vpop.f32.mrf.mxu0
        %v493 = vadd.f32 0.0, %v492
        %v494 = vpop.f32.mrf.mxu0
        %v495 = vadd.f32 0.0, %v494
        %496 = vmatmul.bf16.gmra.mxu0 %v400
        %v497 = vpop.f32.mrf.mxu0
        %v498 = vadd.f32 0.0, %v497
        %v499 = vpop.f32.mrf.mxu0
        %v500 = vadd.f32 0.0, %v499
        %501 = vmatmul.bf16.gmra.mxu0 %v401
        %v502 = vpop.f32.mrf.mxu0
        %v503 = vadd.f32 0.0, %v502
        %v504 = vpop.f32.mrf.mxu0
        %v505 = vadd.f32 0.0, %v504
        %506 = vmatmul.bf16.gmra.mxu0 %v402
        %v507 = vpop.f32.mrf.mxu0
        %v508 = vadd.f32 0.0, %v507
        %v509 = vpop.f32.mrf.mxu0
        %v510 = vadd.f32 0.0, %v509
        %511 = vmatmul.bf16.gmra.mxu0 %v403
        %v512 = vpop.f32.mrf.mxu0
        %v513 = vadd.f32 0.0, %v512
        %v514 = vpop.f32.mrf.mxu0
        %v515 = vadd.f32 0.0, %v514
        %516 = vmatmul.bf16.gmra.mxu0 %v404
        %v517 = vpop.f32.mrf.mxu0
        %v518 = vadd.f32 0.0, %v517
        %v519 = vpop.f32.mrf.mxu0
        %v520 = vadd.f32 0.0, %v519
        %521 = vmatmul.bf16.gmra.mxu0 %v405
        %v522 = vpop.f32.mrf.mxu0
        %v523 = vadd.f32 0.0, %v522
        %v524 = vpop.f32.mrf.mxu0
        %v525 = vadd.f32 0.0, %v524
        %526 = vmatmul.bf16.gmra.mxu0 %v406
        %v527 = vpop.f32.mrf.mxu0
        %v528 = vadd.f32 0.0, %v527
        %v529 = vpop.f32.mrf.mxu0
        %v530 = vadd.f32 0.0, %v529
        %531 = vmatmul.bf16.gmra.mxu0 %v407
        %v532 = vpop.f32.mrf.mxu0
        %v533 = vadd.f32 0.0, %v532
        %v534 = vpop.f32.mrf.mxu0
        %v535 = vadd.f32 0.0, %v534
        %536 = vmatmul.bf16.gmra.mxu0 %v408
        %v537 = vpop.f32.mrf.mxu0
        %v538 = vadd.f32 0.0, %v537
        %v539 = vpop.f32.mrf.mxu0
        %v540 = vadd.f32 0.0, %v539
        %541 = vmatmul.bf16.gmra.mxu0 %v409
        %v542 = vpop.f32.mrf.mxu0
        %v543 = vadd.f32 0.0, %v542
        %v544 = vpop.f32.mrf.mxu0
        %v545 = vadd.f32 0.0, %v544
        %546 = vmatmul.bf16.gmra.mxu0 %v410
        %v547 = vpop.f32.mrf.mxu0
        %v548 = vadd.f32 0.0, %v547
        %v549 = vpop.f32.mrf.mxu0
        %v550 = vadd.f32 0.0, %v549
        %551 = vmatmul.bf16.gmra.mxu0 %v411
        %v552 = vpop.f32.mrf.mxu0
        %v553 = vadd.f32 0.0, %v552
        %v554 = vpop.f32.mrf.mxu0
        %v555 = vadd.f32 0.0, %v554
        %556 = vmatmul.bf16.gmra.mxu0 %v412
        %v557 = vpop.f32.mrf.mxu0
        %v558 = vadd.f32 0.0, %v557
        %v559 = vpop.f32.mrf.mxu0
        %v560 = vadd.f32 0.0, %v559
        %561 = vmatmul.bf16.gmra.mxu0 %v413
        %v562 = vpop.f32.mrf.mxu0
        %v563 = vadd.f32 0.0, %v562
        %v564 = vpop.f32.mrf.mxu0
        %v565 = vadd.f32 0.0, %v564
        %566 = vdwg.mxu0
        %v599 = vrot.slane %v488, 4
        %v600 = vrot.slane %v490, 4
        %v601 = vrot.slane %v493, 4
        %v602 = vrot.slane %v495, 4
        %v603 = vrot.slane %v498, 4
        %v604 = vrot.slane %v500, 4
        %v605 = vrot.slane %v503, 4
        %v606 = vrot.slane %v505, 4
        %v607 = vrot.slane %v508, 4
        %v608 = vrot.slane %v510, 4
        %v609 = vrot.slane %v513, 4
        %v610 = vrot.slane %v515, 4
        %v611 = vrot.slane %v518, 4
        %v612 = vrot.slane %v520, 4
        %v613 = vrot.slane %v523, 4
        %v614 = vrot.slane %v525, 4
        %v615 = vrot.slane %v528, 4
        %v616 = vrot.slane %v530, 4
        %v617 = vrot.slane %v533, 4
        %v618 = vrot.slane %v535, 4
        %v619 = vrot.slane %v538, 4
        %v620 = vrot.slane %v540, 4
        %v621 = vrot.slane %v543, 4
        %v622 = vrot.slane %v545, 4
        %v623 = vrot.slane %v548, 4
        %v624 = vrot.slane %v550, 4
        %v625 = vrot.slane %v553, 4
        %v626 = vrot.slane %v555, 4
        %v627 = vrot.slane %v558, 4
        %v628 = vrot.slane %v560, 4
        %v629 = vrot.slane %v563, 4
        %v630 = vrot.slane %v565, 4
        %vm663 = vcmask 1043456
        %v664 = vsel %vm663, %v488, 0.0
        %v665 = vrot.slane %v664, 4
        %v666 = vadd.f32 %v664, %v665
        %v667 = vrot.slane %v666, 2
        %v668 = vadd.f32 %v666, %v667
        %v669 = vrot.slane %v668, 1
        %v670 = vadd.f32 %v668, %v669
        %v671 = vsel %vm663, %v599, 0.0
        %v672 = vrot.slane %v671, 4
        %v673 = vadd.f32 %v671, %v672
        %v674 = vrot.slane %v673, 2
        %v675 = vadd.f32 %v673, %v674
        %v676 = vrot.slane %v675, 1
        %v677 = vadd.f32 %v675, %v676
        %v678 = vsel %vm663, %v490, 0.0
        %v679 = vrot.slane %v678, 4
        %v680 = vadd.f32 %v678, %v679
        %v681 = vrot.slane %v680, 2
        %v682 = vadd.f32 %v680, %v681
        %v683 = vrot.slane %v682, 1
        %v684 = vadd.f32 %v682, %v683
        %v685 = vsel %vm663, %v600, 0.0
        %v686 = vrot.slane %v685, 4
        %v687 = vadd.f32 %v685, %v686
        %v688 = vrot.slane %v687, 2
        %v689 = vadd.f32 %v687, %v688
        %v690 = vrot.slane %v689, 1
        %v691 = vadd.f32 %v689, %v690
        %v692 = vsel %vm663, %v493, 0.0
        %v693 = vrot.slane %v692, 4
        %v694 = vadd.f32 %v692, %v693
        %v695 = vrot.slane %v694, 2
        %v696 = vadd.f32 %v694, %v695
        %v697 = vrot.slane %v696, 1
        %v698 = vadd.f32 %v696, %v697
        %v699 = vsel %vm663, %v601, 0.0
        %v700 = vrot.slane %v699, 4
        %v701 = vadd.f32 %v699, %v700
        %v702 = vrot.slane %v701, 2
        %v703 = vadd.f32 %v701, %v702
        %v704 = vrot.slane %v703, 1
        %v705 = vadd.f32 %v703, %v704
        %v706 = vsel %vm663, %v495, 0.0
        %v707 = vrot.slane %v706, 4
        %v708 = vadd.f32 %v706, %v707
        %v709 = vrot.slane %v708, 2
        %v710 = vadd.f32 %v708, %v709
        %v711 = vrot.slane %v710, 1
        %v712 = vadd.f32 %v710, %v711
        %v713 = vsel %vm663, %v602, 0.0
        %v714 = vrot.slane %v713, 4
        %v715 = vadd.f32 %v713, %v714
        %v716 = vrot.slane %v715, 2
        %v717 = vadd.f32 %v715, %v716
        %v718 = vrot.slane %v717, 1
        %v719 = vadd.f32 %v717, %v718
        %v720 = vsel %vm663, %v498, 0.0
        %v721 = vrot.slane %v720, 4
        %v722 = vadd.f32 %v720, %v721
        %v723 = vrot.slane %v722, 2
        %v724 = vadd.f32 %v722, %v723
        %v725 = vrot.slane %v724, 1
        %v726 = vadd.f32 %v724, %v725
        %v727 = vsel %vm663, %v603, 0.0
        %v728 = vrot.slane %v727, 4
        %v729 = vadd.f32 %v727, %v728
        %v730 = vrot.slane %v729, 2
        %v731 = vadd.f32 %v729, %v730
        %v732 = vrot.slane %v731, 1
        %v733 = vadd.f32 %v731, %v732
        %v734 = vsel %vm663, %v500, 0.0
        %v735 = vrot.slane %v734, 4
        %v736 = vadd.f32 %v734, %v735
        %v737 = vrot.slane %v736, 2
        %v738 = vadd.f32 %v736, %v737
        %v739 = vrot.slane %v738, 1
        %v740 = vadd.f32 %v738, %v739
        %v741 = vsel %vm663, %v604, 0.0
        %v742 = vrot.slane %v741, 4
        %v743 = vadd.f32 %v741, %v742
        %v744 = vrot.slane %v743, 2
        %v745 = vadd.f32 %v743, %v744
        %v746 = vrot.slane %v745, 1
        %v747 = vadd.f32 %v745, %v746
        %v748 = vsel %vm663, %v503, 0.0
        %v749 = vrot.slane %v748, 4
        %v750 = vadd.f32 %v748, %v749
        %v751 = vrot.slane %v750, 2
        %v752 = vadd.f32 %v750, %v751
        %v753 = vrot.slane %v752, 1
        %v754 = vadd.f32 %v752, %v753
        %v755 = vsel %vm663, %v605, 0.0
        %v756 = vrot.slane %v755, 4
        %v757 = vadd.f32 %v755, %v756
        %v758 = vrot.slane %v757, 2
        %v759 = vadd.f32 %v757, %v758
        %v760 = vrot.slane %v759, 1
        %v761 = vadd.f32 %v759, %v760
        %v762 = vsel %vm663, %v505, 0.0
        %v763 = vrot.slane %v762, 4
        %v764 = vadd.f32 %v762, %v763
        %v765 = vrot.slane %v764, 2
        %v766 = vadd.f32 %v764, %v765
        %v767 = vrot.slane %v766, 1
        %v768 = vadd.f32 %v766, %v767
        %v769 = vsel %vm663, %v606, 0.0
        %v770 = vrot.slane %v769, 4
        %v771 = vadd.f32 %v769, %v770
        %v772 = vrot.slane %v771, 2
        %v773 = vadd.f32 %v771, %v772
        %v774 = vrot.slane %v773, 1
        %v775 = vadd.f32 %v773, %v774
        %v776 = vsel %vm663, %v508, 0.0
        %v777 = vrot.slane %v776, 4
        %v778 = vadd.f32 %v776, %v777
        %v779 = vrot.slane %v778, 2
        %v780 = vadd.f32 %v778, %v779
        %v781 = vrot.slane %v780, 1
        %v782 = vadd.f32 %v780, %v781
        %v783 = vsel %vm663, %v607, 0.0
        %v784 = vrot.slane %v783, 4
        %v785 = vadd.f32 %v783, %v784
        %v786 = vrot.slane %v785, 2
        %v787 = vadd.f32 %v785, %v786
        %v788 = vrot.slane %v787, 1
        %v789 = vadd.f32 %v787, %v788
        %v790 = vsel %vm663, %v510, 0.0
        %v791 = vrot.slane %v790, 4
        %v792 = vadd.f32 %v790, %v791
        %v793 = vrot.slane %v792, 2
        %v794 = vadd.f32 %v792, %v793
        %v795 = vrot.slane %v794, 1
        %v796 = vadd.f32 %v794, %v795
        %v797 = vsel %vm663, %v608, 0.0
        %v798 = vrot.slane %v797, 4
        %v799 = vadd.f32 %v797, %v798
        %v800 = vrot.slane %v799, 2
        %v801 = vadd.f32 %v799, %v800
        %v802 = vrot.slane %v801, 1
        %v803 = vadd.f32 %v801, %v802
        %v804 = vsel %vm663, %v513, 0.0
        %v805 = vrot.slane %v804, 4
        %v806 = vadd.f32 %v804, %v805
        %v807 = vrot.slane %v806, 2
        %v808 = vadd.f32 %v806, %v807
        %v809 = vrot.slane %v808, 1
        %v810 = vadd.f32 %v808, %v809
        %v811 = vsel %vm663, %v609, 0.0
        %v812 = vrot.slane %v811, 4
        %v813 = vadd.f32 %v811, %v812
        %v814 = vrot.slane %v813, 2
        %v815 = vadd.f32 %v813, %v814
        %v816 = vrot.slane %v815, 1
        %v817 = vadd.f32 %v815, %v816
        %v818 = vsel %vm663, %v515, 0.0
        %v819 = vrot.slane %v818, 4
        %v820 = vadd.f32 %v818, %v819
        %v821 = vrot.slane %v820, 2
        %v822 = vadd.f32 %v820, %v821
        %v823 = vrot.slane %v822, 1
        %v824 = vadd.f32 %v822, %v823
        %v825 = vsel %vm663, %v610, 0.0
        %v826 = vrot.slane %v825, 4
        %v827 = vadd.f32 %v825, %v826
        %v828 = vrot.slane %v827, 2
        %v829 = vadd.f32 %v827, %v828
        %v830 = vrot.slane %v829, 1
        %v831 = vadd.f32 %v829, %v830
        %v832 = vsel %vm663, %v518, 0.0
        %v833 = vrot.slane %v832, 4
        %v834 = vadd.f32 %v832, %v833
        %v835 = vrot.slane %v834, 2
        %v836 = vadd.f32 %v834, %v835
        %v837 = vrot.slane %v836, 1
        %v838 = vadd.f32 %v836, %v837
        %v839 = vsel %vm663, %v611, 0.0
        %v840 = vrot.slane %v839, 4
        %v841 = vadd.f32 %v839, %v840
        %v842 = vrot.slane %v841, 2
        %v843 = vadd.f32 %v841, %v842
        %v844 = vrot.slane %v843, 1
        %v845 = vadd.f32 %v843, %v844
        %v846 = vsel %vm663, %v520, 0.0
        %v847 = vrot.slane %v846, 4
        %v848 = vadd.f32 %v846, %v847
        %v849 = vrot.slane %v848, 2
        %v850 = vadd.f32 %v848, %v849
        %v851 = vrot.slane %v850, 1
        %v852 = vadd.f32 %v850, %v851
        %v853 = vsel %vm663, %v612, 0.0
        %v854 = vrot.slane %v853, 4
        %v855 = vadd.f32 %v853, %v854
        %v856 = vrot.slane %v855, 2
        %v857 = vadd.f32 %v855, %v856
        %v858 = vrot.slane %v857, 1
        %v859 = vadd.f32 %v857, %v858
        %v860 = vsel %vm663, %v523, 0.0
        %v861 = vrot.slane %v860, 4
        %v862 = vadd.f32 %v860, %v861
        %v863 = vrot.slane %v862, 2
        %v864 = vadd.f32 %v862, %v863
        %v865 = vrot.slane %v864, 1
        %v866 = vadd.f32 %v864, %v865
        %v867 = vsel %vm663, %v613, 0.0
        %v868 = vrot.slane %v867, 4
        %v869 = vadd.f32 %v867, %v868
        %v870 = vrot.slane %v869, 2
        %v871 = vadd.f32 %v869, %v870
        %v872 = vrot.slane %v871, 1
        %v873 = vadd.f32 %v871, %v872
        %v874 = vsel %vm663, %v525, 0.0
        %v875 = vrot.slane %v874, 4
        %v876 = vadd.f32 %v874, %v875
        %v877 = vrot.slane %v876, 2
        %v878 = vadd.f32 %v876, %v877
        %v879 = vrot.slane %v878, 1
        %v880 = vadd.f32 %v878, %v879
        %v881 = vsel %vm663, %v614, 0.0
        %v882 = vrot.slane %v881, 4
        %v883 = vadd.f32 %v881, %v882
        %v884 = vrot.slane %v883, 2
        %v885 = vadd.f32 %v883, %v884
        %v886 = vrot.slane %v885, 1
        %v887 = vadd.f32 %v885, %v886
        %v888 = vsel %vm663, %v528, 0.0
        %v889 = vrot.slane %v888, 4
        %v890 = vadd.f32 %v888, %v889
        %v891 = vrot.slane %v890, 2
        %v892 = vadd.f32 %v890, %v891
        %v893 = vrot.slane %v892, 1
        %v894 = vadd.f32 %v892, %v893
        %v895 = vsel %vm663, %v615, 0.0
        %v896 = vrot.slane %v895, 4
        %v897 = vadd.f32 %v895, %v896
        %v898 = vrot.slane %v897, 2
        %v899 = vadd.f32 %v897, %v898
        %v900 = vrot.slane %v899, 1
        %v901 = vadd.f32 %v899, %v900
        %v902 = vsel %vm663, %v530, 0.0
        %v903 = vrot.slane %v902, 4
        %v904 = vadd.f32 %v902, %v903
        %v905 = vrot.slane %v904, 2
        %v906 = vadd.f32 %v904, %v905
        %v907 = vrot.slane %v906, 1
        %v908 = vadd.f32 %v906, %v907
        %v909 = vsel %vm663, %v616, 0.0
        %v910 = vrot.slane %v909, 4
        %v911 = vadd.f32 %v909, %v910
        %v912 = vrot.slane %v911, 2
        %v913 = vadd.f32 %v911, %v912
        %v914 = vrot.slane %v913, 1
        %v915 = vadd.f32 %v913, %v914
        %v916 = vsel %vm663, %v533, 0.0
        %v917 = vrot.slane %v916, 4
        %v918 = vadd.f32 %v916, %v917
        %v919 = vrot.slane %v918, 2
        %v920 = vadd.f32 %v918, %v919
        %v921 = vrot.slane %v920, 1
        %v922 = vadd.f32 %v920, %v921
        %v923 = vsel %vm663, %v617, 0.0
        %v924 = vrot.slane %v923, 4
        %v925 = vadd.f32 %v923, %v924
        %v926 = vrot.slane %v925, 2
        %v927 = vadd.f32 %v925, %v926
        %v928 = vrot.slane %v927, 1
        %v929 = vadd.f32 %v927, %v928
        %v930 = vsel %vm663, %v535, 0.0
        %v931 = vrot.slane %v930, 4
        %v932 = vadd.f32 %v930, %v931
        %v933 = vrot.slane %v932, 2
        %v934 = vadd.f32 %v932, %v933
        %v935 = vrot.slane %v934, 1
        %v936 = vadd.f32 %v934, %v935
        %v937 = vsel %vm663, %v618, 0.0
        %v938 = vrot.slane %v937, 4
        %v939 = vadd.f32 %v937, %v938
        %v940 = vrot.slane %v939, 2
        %v941 = vadd.f32 %v939, %v940
        %v942 = vrot.slane %v941, 1
        %v943 = vadd.f32 %v941, %v942
        %v944 = vsel %vm663, %v538, 0.0
        %v945 = vrot.slane %v944, 4
        %v946 = vadd.f32 %v944, %v945
        %v947 = vrot.slane %v946, 2
        %v948 = vadd.f32 %v946, %v947
        %v949 = vrot.slane %v948, 1
        %v950 = vadd.f32 %v948, %v949
        %v951 = vsel %vm663, %v619, 0.0
        %v952 = vrot.slane %v951, 4
        %v953 = vadd.f32 %v951, %v952
        %v954 = vrot.slane %v953, 2
        %v955 = vadd.f32 %v953, %v954
        %v956 = vrot.slane %v955, 1
        %v957 = vadd.f32 %v955, %v956
        %v958 = vsel %vm663, %v540, 0.0
        %v959 = vrot.slane %v958, 4
        %v960 = vadd.f32 %v958, %v959
        %v961 = vrot.slane %v960, 2
        %v962 = vadd.f32 %v960, %v961
        %v963 = vrot.slane %v962, 1
        %v964 = vadd.f32 %v962, %v963
        %v965 = vsel %vm663, %v620, 0.0
        %v966 = vrot.slane %v965, 4
        %v967 = vadd.f32 %v965, %v966
        %v968 = vrot.slane %v967, 2
        %v969 = vadd.f32 %v967, %v968
        %v970 = vrot.slane %v969, 1
        %v971 = vadd.f32 %v969, %v970
        %v972 = vsel %vm663, %v543, 0.0
        %v973 = vrot.slane %v972, 4
        %v974 = vadd.f32 %v972, %v973
        %v975 = vrot.slane %v974, 2
        %v976 = vadd.f32 %v974, %v975
        %v977 = vrot.slane %v976, 1
        %v978 = vadd.f32 %v976, %v977
        %v979 = vsel %vm663, %v621, 0.0
        %v980 = vrot.slane %v979, 4
        %v981 = vadd.f32 %v979, %v980
        %v982 = vrot.slane %v981, 2
        %v983 = vadd.f32 %v981, %v982
        %v984 = vrot.slane %v983, 1
        %v985 = vadd.f32 %v983, %v984
        %v986 = vsel %vm663, %v545, 0.0
        %v987 = vrot.slane %v986, 4
        %v988 = vadd.f32 %v986, %v987
        %v989 = vrot.slane %v988, 2
        %v990 = vadd.f32 %v988, %v989
        %v991 = vrot.slane %v990, 1
        %v992 = vadd.f32 %v990, %v991
        %v993 = vsel %vm663, %v622, 0.0
        %v994 = vrot.slane %v993, 4
        %v995 = vadd.f32 %v993, %v994
        %v996 = vrot.slane %v995, 2
        %v997 = vadd.f32 %v995, %v996
        %v998 = vrot.slane %v997, 1
        %v999 = vadd.f32 %v997, %v998
        %v1000 = vsel %vm663, %v548, 0.0
        %v1001 = vrot.slane %v1000, 4
        %v1002 = vadd.f32 %v1000, %v1001
        %v1003 = vrot.slane %v1002, 2
        %v1004 = vadd.f32 %v1002, %v1003
        %v1005 = vrot.slane %v1004, 1
        %v1006 = vadd.f32 %v1004, %v1005
        %v1007 = vsel %vm663, %v623, 0.0
        %v1008 = vrot.slane %v1007, 4
        %v1009 = vadd.f32 %v1007, %v1008
        %v1010 = vrot.slane %v1009, 2
        %v1011 = vadd.f32 %v1009, %v1010
        %v1012 = vrot.slane %v1011, 1
        %v1013 = vadd.f32 %v1011, %v1012
        %v1014 = vsel %vm663, %v550, 0.0
        %v1015 = vrot.slane %v1014, 4
        %v1016 = vadd.f32 %v1014, %v1015
        %v1017 = vrot.slane %v1016, 2
        %v1018 = vadd.f32 %v1016, %v1017
        %v1019 = vrot.slane %v1018, 1
        %v1020 = vadd.f32 %v1018, %v1019
        %v1021 = vsel %vm663, %v624, 0.0
        %v1022 = vrot.slane %v1021, 4
        %v1023 = vadd.f32 %v1021, %v1022
        %v1024 = vrot.slane %v1023, 2
        %v1025 = vadd.f32 %v1023, %v1024
        %v1026 = vrot.slane %v1025, 1
        %v1027 = vadd.f32 %v1025, %v1026
        %v1028 = vsel %vm663, %v553, 0.0
        %v1029 = vrot.slane %v1028, 4
        %v1030 = vadd.f32 %v1028, %v1029
        %v1031 = vrot.slane %v1030, 2
        %v1032 = vadd.f32 %v1030, %v1031
        %v1033 = vrot.slane %v1032, 1
        %v1034 = vadd.f32 %v1032, %v1033
        %v1035 = vsel %vm663, %v625, 0.0
        %v1036 = vrot.slane %v1035, 4
        %v1037 = vadd.f32 %v1035, %v1036
        %v1038 = vrot.slane %v1037, 2
        %v1039 = vadd.f32 %v1037, %v1038
        %v1040 = vrot.slane %v1039, 1
        %v1041 = vadd.f32 %v1039, %v1040
        %v1042 = vsel %vm663, %v555, 0.0
        %v1043 = vrot.slane %v1042, 4
        %v1044 = vadd.f32 %v1042, %v1043
        %v1045 = vrot.slane %v1044, 2
        %v1046 = vadd.f32 %v1044, %v1045
        %v1047 = vrot.slane %v1046, 1
        %v1048 = vadd.f32 %v1046, %v1047
        %v1049 = vsel %vm663, %v626, 0.0
        %v1050 = vrot.slane %v1049, 4
        %v1051 = vadd.f32 %v1049, %v1050
        %v1052 = vrot.slane %v1051, 2
        %v1053 = vadd.f32 %v1051, %v1052
        %v1054 = vrot.slane %v1053, 1
        %v1055 = vadd.f32 %v1053, %v1054
        %v1056 = vsel %vm663, %v558, 0.0
        %v1057 = vrot.slane %v1056, 4
        %v1058 = vadd.f32 %v1056, %v1057
        %v1059 = vrot.slane %v1058, 2
        %v1060 = vadd.f32 %v1058, %v1059
        %v1061 = vrot.slane %v1060, 1
        %v1062 = vadd.f32 %v1060, %v1061
        %v1063 = vsel %vm663, %v627, 0.0
        %v1064 = vrot.slane %v1063, 4
        %v1065 = vadd.f32 %v1063, %v1064
        %v1066 = vrot.slane %v1065, 2
        %v1067 = vadd.f32 %v1065, %v1066
        %v1068 = vrot.slane %v1067, 1
        %v1069 = vadd.f32 %v1067, %v1068
        %v1070 = vsel %vm663, %v560, 0.0
        %v1071 = vrot.slane %v1070, 4
        %v1072 = vadd.f32 %v1070, %v1071
        %v1073 = vrot.slane %v1072, 2
        %v1074 = vadd.f32 %v1072, %v1073
        %v1075 = vrot.slane %v1074, 1
        %v1076 = vadd.f32 %v1074, %v1075
        %v1077 = vsel %vm663, %v628, 0.0
        %v1078 = vrot.slane %v1077, 4
        %v1079 = vadd.f32 %v1077, %v1078
        %v1080 = vrot.slane %v1079, 2
        %v1081 = vadd.f32 %v1079, %v1080
        %v1082 = vrot.slane %v1081, 1
        %v1083 = vadd.f32 %v1081, %v1082
        %v1084 = vsel %vm663, %v563, 0.0
        %v1085 = vrot.slane %v1084, 4
        %v1086 = vadd.f32 %v1084, %v1085
        %v1087 = vrot.slane %v1086, 2
        %v1088 = vadd.f32 %v1086, %v1087
        %v1089 = vrot.slane %v1088, 1
        %v1090 = vadd.f32 %v1088, %v1089
        %v1091 = vsel %vm663, %v629, 0.0
        %v1092 = vrot.slane %v1091, 4
        %v1093 = vadd.f32 %v1091, %v1092
        %v1094 = vrot.slane %v1093, 2
        %v1095 = vadd.f32 %v1093, %v1094
        %v1096 = vrot.slane %v1095, 1
        %v1097 = vadd.f32 %v1095, %v1096
        %v1098 = vsel %vm663, %v565, 0.0
        %v1099 = vrot.slane %v1098, 4
        %v1100 = vadd.f32 %v1098, %v1099
        %v1101 = vrot.slane %v1100, 2
        %v1102 = vadd.f32 %v1100, %v1101
        %v1103 = vrot.slane %v1102, 1
        %v1104 = vadd.f32 %v1102, %v1103
        %v1105 = vsel %vm663, %v630, 0.0
        %v1106 = vrot.slane %v1105, 4
        %v1107 = vadd.f32 %v1105, %v1106
        %v1108 = vrot.slane %v1107, 2
        %v1109 = vadd.f32 %v1107, %v1108
        %v1110 = vrot.slane %v1109, 1
        %v1111 = vadd.f32 %v1109, %v1110
        %v1112 = vmul.f32 %v670, 0.25
        %v1113 = vmul.f32 %v677, 0.25
        %v1114 = vmul.f32 %v684, 0.25
        %v1115 = vmul.f32 %v691, 0.25
        %v1116 = vmul.f32 %v698, 0.25
        %v1117 = vmul.f32 %v705, 0.25
        %v1118 = vmul.f32 %v712, 0.25
        %v1119 = vmul.f32 %v719, 0.25
        %v1120 = vmul.f32 %v726, 0.25
        %v1121 = vmul.f32 %v733, 0.25
        %v1122 = vmul.f32 %v740, 0.25
        %v1123 = vmul.f32 %v747, 0.25
        %v1124 = vmul.f32 %v754, 0.25
        %v1125 = vmul.f32 %v761, 0.25
        %v1126 = vmul.f32 %v768, 0.25
        %v1127 = vmul.f32 %v775, 0.25
        %v1128 = vmul.f32 %v782, 0.25
        %v1129 = vmul.f32 %v789, 0.25
        %v1130 = vmul.f32 %v796, 0.25
        %v1131 = vmul.f32 %v803, 0.25
        %v1132 = vmul.f32 %v810, 0.25
        %v1133 = vmul.f32 %v817, 0.25
        %v1134 = vmul.f32 %v824, 0.25
        %v1135 = vmul.f32 %v831, 0.25
        %v1136 = vmul.f32 %v838, 0.25
        %v1137 = vmul.f32 %v845, 0.25
        %v1138 = vmul.f32 %v852, 0.25
        %v1139 = vmul.f32 %v859, 0.25
        %v1140 = vmul.f32 %v866, 0.25
        %v1141 = vmul.f32 %v873, 0.25
        %v1142 = vmul.f32 %v880, 0.25
        %v1143 = vmul.f32 %v887, 0.25
        %v1144 = vmul.f32 %v894, 0.25
        %v1145 = vmul.f32 %v901, 0.25
        %v1146 = vmul.f32 %v908, 0.25
        %v1147 = vmul.f32 %v915, 0.25
        %v1148 = vmul.f32 %v922, 0.25
        %v1149 = vmul.f32 %v929, 0.25
        %v1150 = vmul.f32 %v936, 0.25
        %v1151 = vmul.f32 %v943, 0.25
        %v1152 = vmul.f32 %v950, 0.25
        %v1153 = vmul.f32 %v957, 0.25
        %v1154 = vmul.f32 %v964, 0.25
        %v1155 = vmul.f32 %v971, 0.25
        %v1156 = vmul.f32 %v978, 0.25
        %v1157 = vmul.f32 %v985, 0.25
        %v1158 = vmul.f32 %v992, 0.25
        %v1159 = vmul.f32 %v999, 0.25
        %v1160 = vmul.f32 %v1006, 0.25
        %v1161 = vmul.f32 %v1013, 0.25
        %v1162 = vmul.f32 %v1020, 0.25
        %v1163 = vmul.f32 %v1027, 0.25
        %v1164 = vmul.f32 %v1034, 0.25
        %v1165 = vmul.f32 %v1041, 0.25
        %v1166 = vmul.f32 %v1048, 0.25
        %v1167 = vmul.f32 %v1055, 0.25
        %v1168 = vmul.f32 %v1062, 0.25
        %v1169 = vmul.f32 %v1069, 0.25
        %v1170 = vmul.f32 %v1076, 0.25
        %v1171 = vmul.f32 %v1083, 0.25
        %v1172 = vmul.f32 %v1090, 0.25
        %v1173 = vmul.f32 %v1097, 0.25
        %v1174 = vmul.f32 %v1104, 0.25
        %v1175 = vmul.f32 %v1111, 0.25
        %vm1240 = vcmask 1041409
        %v1241 = vsel %vm1240, %v1113, %v1112
        %vm1242 = vcmask 1042434
        %v1243 = vsel %vm1242, %v1114, %v1241
        %vm1244 = vcmask 1043459
        %v1245 = vsel %vm1244, %v1115, %v1243
        %vm1246 = vcmask 1044484
        %v1247 = vsel %vm1246, %v1116, %v1245
        %vm1248 = vcmask 1045509
        %v1249 = vsel %vm1248, %v1117, %v1247
        %vm1250 = vcmask 1046534
        %v1251 = vsel %vm1250, %v1118, %v1249
        %vm1252 = vcmask 1047559
        %v1253 = vsel %vm1252, %v1119, %v1251
        %v1254 = vsel %vm1240, %v1121, %v1120
        %v1255 = vsel %vm1242, %v1122, %v1254
        %v1256 = vsel %vm1244, %v1123, %v1255
        %v1257 = vsel %vm1246, %v1124, %v1256
        %v1258 = vsel %vm1248, %v1125, %v1257
        %v1259 = vsel %vm1250, %v1126, %v1258
        %v1260 = vsel %vm1252, %v1127, %v1259
        %v1261 = vsel %vm1240, %v1129, %v1128
        %v1262 = vsel %vm1242, %v1130, %v1261
        %v1263 = vsel %vm1244, %v1131, %v1262
        %v1264 = vsel %vm1246, %v1132, %v1263
        %v1265 = vsel %vm1248, %v1133, %v1264
        %v1266 = vsel %vm1250, %v1134, %v1265
        %v1267 = vsel %vm1252, %v1135, %v1266
        %v1268 = vsel %vm1240, %v1137, %v1136
        %v1269 = vsel %vm1242, %v1138, %v1268
        %v1270 = vsel %vm1244, %v1139, %v1269
        %v1271 = vsel %vm1246, %v1140, %v1270
        %v1272 = vsel %vm1248, %v1141, %v1271
        %v1273 = vsel %vm1250, %v1142, %v1272
        %v1274 = vsel %vm1252, %v1143, %v1273
        %v1275 = vsel %vm1240, %v1145, %v1144
        %v1276 = vsel %vm1242, %v1146, %v1275
        %v1277 = vsel %vm1244, %v1147, %v1276
        %v1278 = vsel %vm1246, %v1148, %v1277
        %v1279 = vsel %vm1248, %v1149, %v1278
        %v1280 = vsel %vm1250, %v1150, %v1279
        %v1281 = vsel %vm1252, %v1151, %v1280
        %v1282 = vsel %vm1240, %v1153, %v1152
        %v1283 = vsel %vm1242, %v1154, %v1282
        %v1284 = vsel %vm1244, %v1155, %v1283
        %v1285 = vsel %vm1246, %v1156, %v1284
        %v1286 = vsel %vm1248, %v1157, %v1285
        %v1287 = vsel %vm1250, %v1158, %v1286
        %v1288 = vsel %vm1252, %v1159, %v1287
        %v1289 = vsel %vm1240, %v1161, %v1160
        %v1290 = vsel %vm1242, %v1162, %v1289
        %v1291 = vsel %vm1244, %v1163, %v1290
        %v1292 = vsel %vm1246, %v1164, %v1291
        %v1293 = vsel %vm1248, %v1165, %v1292
        %v1294 = vsel %vm1250, %v1166, %v1293
        %v1295 = vsel %vm1252, %v1167, %v1294
        %v1296 = vsel %vm1240, %v1169, %v1168
        %v1297 = vsel %vm1242, %v1170, %v1296
        %v1298 = vsel %vm1244, %v1171, %v1297
        %v1299 = vsel %vm1246, %v1172, %v1298
        %v1300 = vsel %vm1248, %v1173, %v1299
        %v1301 = vsel %vm1250, %v1174, %v1300
        %v1302 = vsel %vm1252, %v1175, %v1301
        %1311 = vst [vmem:[%s218] sm:$0xff] %v1253
        %1312 = vst [vmem:[%s218 + $0x8] sm:$0xff] %v1260
        %1313 = vst [vmem:[%s218 + $0x10] sm:$0xff] %v1267
        %1314 = vst [vmem:[%s218 + $0x18] sm:$0xff] %v1274
        %1315 = vst [vmem:[%s218 + $0x20] sm:$0xff] %v1281
        %1316 = vst [vmem:[%s218 + $0x28] sm:$0xff] %v1288
        %1317 = vst [vmem:[%s218 + $0x30] sm:$0xff] %v1295
        %1318 = vst [vmem:[%s218 + $0x38] sm:$0xff] %v1302
        %s1319 = sand.u32 %s134, 1
        %s1320 = scalar_lea.sflag [#allocation3], %s1319
        %s1321 = sand.u32 %s134, 1
        %s1322 = smul.addr %s1321, 64
        %s1323 = scalar_lea.vmem [#allocation2], %s1322
        // Predicated region
        $region37: #{transition_block_forward.1} parent=35 // pred_check
          %p1324 = pneg %p144
        $region38: #{transition_block_forward.1} parent=35 // pred_check_branch
          %1326 = sbr.rel (%p1324) target = $region40
        $region39: #{transition_block_forward.1} parent=35 // pred_region
          %s1327 = smul.u32 8, %s22
          %1329 = vsyncadd %s1320, 0
          %s1330 = sadd.s32 %s23, %s1327
          %s1331 = smul.addr %s1330, 8
          %s1332 = scalar_lea.hbm %s4, %s1331
          %s1333 = sshll.u32 %s1323, 4
          %s1334 = int_to_ptr.vmem [resolvable:$true] %s1333
          %s1335 = sshll.u32 %s1332, 4
          %s1336 = int_to_ptr.hbm [resolvable:$true] %s1335
          %1341 = dma.vmem_to_hbm [thread:$0]  %s1334, 1024, %s1336, %s1320, 128, 128, 8
        $region40: #{transition_block_forward.1} parent=35 // pred_fallthru
          _
      $region36: #{transition_block_forward.1} parent=5 // pred_fallthru
        _
      %p1342 = scmp.le.s32.totalorder 2, %s13
      // Predicated region
      $region41: #{transition_block_forward.1} parent=5 // pred_check
        %p1343 = pneg %p1342
      $region42: #{transition_block_forward.1} parent=5 // pred_check_branch
        %1345 = sbr.rel (%p1343) target = $region44
      $region43: #{transition_block_forward.1} parent=5 // pred_region
        %s1346 = ssub.s32 %s13, 2
        // Predicated region
        $region45: #{transition_block_forward.1} parent=43 // pred_check
          %p1347 = pneg %p150
        $region46: #{transition_block_forward.1} parent=43 // pred_check_branch
          %1349 = sbr.rel (%p1347) target = $region48
        $region47: #{transition_block_forward.1} parent=43 // pred_region
          %s1350 = sand.u32 %s135, 1
          %s1351 = scalar_lea.sflag [#allocation3], %s1350
          %s1352 = sand.u32 %s135, 1
          %s1353 = smul.addr %s1352, 64
          %s1354 = scalar_lea.vmem [#allocation2], %s1353
          %1356 = dma.done %s1351, 1024
        $region48: #{transition_block_forward.1} parent=43 // pred_fallthru
          _
      $region44: #{transition_block_forward.1} parent=5 // pred_fallthru
        _
    $region6: #{transition_block_forward.1} parent=1 // loop_footer
      %s17 = sadd.s32 1, %s13
    $region7: #{transition_block_forward.1} parent=1 // loop_footer_branch
      %12 = sbr.rel target = $region3
    $region8: #{transition_block_forward.1} parent=1 // loop_exit
      _
    %1357 = vsyncpa [#allocation3], 1
    %s1358 = scalar_lea.sflag [#allocation3], 1
    %1359 = vsyncpa %s1358, 1

</llo_original>
